<compile_context>
chip_gen: v7x
topology: tpu7x:2x2x1
jax: 0.10.0
libtpu: 0.0.40
codegen_flags: <defaults>
</compile_context>

<pallas_src>
import jax
import jax.numpy as jnp
from jax.experimental import pallas as pl
from jax.experimental.pallas import tpu as pltpu

_LANE = 128
_TARGET_TILE_BYTES = 2 * 1024 * 1024   # ~2 MiB/tile: (in+out) x double-buffer = 8 MiB
_SMALL_BYTES = 256 * 1024              # below this, plain XLA affine wins


def _affine_kernel(w_ref, b_ref, x_ref, o_ref):
    # w_ref, b_ref: SMEM scalars (shape (1,)); x_ref/o_ref: VMEM tiles.
    o_ref[...] = x_ref[...] * w_ref[0] + b_ref[0]


def _sublane_multiple(dtype):
    # 8 sublanes for 4-byte dtypes, 16 for bf16, 32 for int8/fp8.
    return max(8, 32 // jnp.dtype(dtype).itemsize)


def _dim_semantics(n_axes, leading_size):
    """PARALLEL everywhere; CORE_PARALLEL on the leading axis on v7x (2 TCs)."""
    try:
        kind = jax.devices()[0].device_kind.lower()
    except Exception:
        kind = ""
    lead = pltpu.PARALLEL
    if "v7" in kind and hasattr(pltpu, "CORE_PARALLEL") and leading_size % 2 == 0:
        lead = pltpu.CORE_PARALLEL
    return (lead,) + (pltpu.ARBITRARY,) * (n_axes - 1)


def _pallas_affine_2d(x2d, w_arr, b_arr, tile_r, tile_c):
    """Elementwise affine over a 2-D array with a (tile_r, tile_c) block."""
    R, C = x2d.shape
    grid = (pl.cdiv(R, tile_r), pl.cdiv(C, tile_c))
    return pl.pallas_call(
        _affine_kernel,
        out_shape=jax.ShapeDtypeStruct((R, C), x2d.dtype),
        grid_spec=pltpu.PrefetchScalarGridSpec(
            num_scalar_prefetch=0,
            grid=grid,
            in_specs=[
                pl.BlockSpec(memory_space=pltpu.SMEM),               # w
                pl.BlockSpec(memory_space=pltpu.SMEM),               # b
                pl.BlockSpec((tile_r, tile_c), lambda i, j: (i, j)),  # x tile
            ],
            out_specs=pl.BlockSpec((tile_r, tile_c), lambda i, j: (i, j)),
        ),
        compiler_params=pltpu.CompilerParams(
            dimension_semantics=_dim_semantics(2, grid[0]),
        ),
    )(w_arr, b_arr, x2d)


def test1_forward(x, weight, bias, force_kernel=False):
    """x: (B, N); weight/bias: scalar params of the Conv1d(1, 1, k=1)."""
    B, N = x.shape
    dtype = x.dtype
    itemsize = jnp.dtype(dtype).itemsize
    total = B * N

    w_arr = jnp.asarray(weight, dtype=dtype).reshape((1,))
    b_arr = jnp.asarray(bias, dtype=dtype).reshape((1,))

    # Tiny-input fast path: fixed pallas_call overhead dominates; let XLA fuse.
    if not force_kernel and total * itemsize < _SMALL_BYTES:
        return x * w_arr[0] + b_arr[0]

    sub = _sublane_multiple(dtype)

    if N % _LANE == 0:
        # ---- direct path: no relayout, no padding, no epilogue slice ----
        tile_c = min(N, 16 * _LANE)                    # lane-dense, <= 2048 lanes
        target_rows = max(sub, _TARGET_TILE_BYTES // (tile_c * itemsize))
        if B <= target_rows:
            tile_r = B                                 # full dim: always legal
        else:
            tile_r = max(sub, (target_rows // sub) * sub)
        return _pallas_affine_2d(x, w_arr, b_arr, tile_r, tile_c)

    # ---- fallback: ragged N -> lane-dense (rows, 128) slab ----
    rows = pl.cdiv(total, _LANE)
    rows_p = ((rows + sub - 1) // sub) * sub           # dtype-aware sublane pad only
    max_tile_rows = max(sub, _TARGET_TILE_BYTES // (_LANE * itemsize))
    tile_r = min(rows_p, (max_tile_rows // sub) * sub)

    x_flat = x.reshape(-1)
    pad = rows_p * _LANE - total
    if pad:
        x_flat = jnp.pad(x_flat, (0, pad))
    x2d = x_flat.reshape(rows_p, _LANE)

    grid = (pl.cdiv(rows_p, tile_r),)
    out2d = pl.pallas_call(
        _affine_kernel,
        out_shape=jax.ShapeDtypeStruct((rows_p, _LANE), dtype),
        grid_spec=pltpu.PrefetchScalarGridSpec(
            num_scalar_prefetch=0,
            grid=grid,
            in_specs=[
                pl.BlockSpec(memory_space=pltpu.SMEM),            # w
                pl.BlockSpec(memory_space=pltpu.SMEM),            # b
                pl.BlockSpec((tile_r, _LANE), lambda i: (i, 0)),  # x tile
            ],
            out_specs=pl.BlockSpec((tile_r, _LANE), lambda i: (i, 0)),
        ),
        compiler_params=pltpu.CompilerParams(
            dimension_semantics=_dim_semantics(1, grid[0]),
        ),
    )(w_arr, b_arr, x2d)

    return out2d.reshape(-1)[:total].reshape(B, N)


def test1_reference(x, weight, bias):
    return x * weight + bias


if __name__ == "__main__":
    key = jax.random.PRNGKey(0)
    kx, kw, kb = jax.random.split(key, 3)

    # Conv1d(1, 1, kernel_size=1) parameters: weight (1,1,1), bias (1,) in
    # PyTorch -> single scalars here.
    weight = jax.random.normal(kw, (), dtype=jnp.float32)
    bias = jax.random.normal(kb, (), dtype=jnp.float32)

    # 1) Small shape from the module spec; force the Pallas kernel (direct path).
    B, N = 2, 128
    x = jax.random.normal(kx, (B, N), dtype=jnp.float32)
    out = jax.block_until_ready(test1_forward(x, weight, bias, force_kernel=True))
    assert out.shape == (B, N)
    assert jnp.allclose(out, test1_reference(x, weight, bias),
                        atol=1e-6, rtol=1e-6), "mismatch vs reference (small)"

    # 2) Larger multi-tile shape exercising the 2-D grid direct path (no relayout).
    B2, N2 = 64, 4096
    x2 = jax.random.normal(kx, (B2, N2), dtype=jnp.float32)
    out2 = jax.block_until_ready(test1_forward(x2, weight, bias))
    assert jnp.allclose(out2, test1_reference(x2, weight, bias),
                        atol=1e-6, rtol=1e-6), "mismatch vs reference (large)"

    # 3) Ragged N exercising the flatten+pad fallback path.
    B3, N3 = 8, 200
    x3 = jax.random.normal(kx, (B3, N3), dtype=jnp.float32)
    out3 = jax.block_until_ready(test1_forward(x3, weight, bias, force_kernel=True))
    assert jnp.allclose(out3, test1_reference(x3, weight, bias),
                        atol=1e-6, rtol=1e-6), "mismatch vs reference (ragged)"

    # 4) Tiny-input fast path (plain XLA affine).
    out4 = jax.block_until_ready(test1_forward(x, weight, bias))
    assert jnp.allclose(out4, test1_reference(x, weight, bias),
                        atol=1e-6, rtol=1e-6), "mismatch vs reference (fast path)"

    print("KERNEL_OK")
</pallas_src>

<mosaic_0001>
module attributes {stable_mosaic.version = 11 : i64} {
  func.func @_affine_kernel(%arg0: i32, %arg1: i32, %arg2: memref<1xf32, #tpu.memory_space<smem>>, %arg3: memref<1xf32, #tpu.memory_space<smem>>, %arg4: memref<2x128xf32, #tpu.memory_space<vmem>>, %arg5: memref<2x128xf32, #tpu.memory_space<vmem>>) attributes {dimension_semantics = [#tpu.dimension_semantics<parallel>, #tpu.dimension_semantics<arbitrary>], iteration_bounds = array<i64: 1, 1>, scalar_prefetch = 0 : i64, scratch_operands = 0 : i64, tpu.core_type = #tpu.core_type<tc>, window_params = [{transform_indices = @transform_0, window_bounds = array<i64: 1>}, {transform_indices = @transform_1, window_bounds = array<i64: 1>}, {transform_indices = @transform_2, window_bounds = array<i64: 2, 128>}, {transform_indices = @transform_3, window_bounds = array<i64: 2, 128>}]} {
    %c0 = arith.constant 0 : index
    %c0_0 = arith.constant 0 : index
    %0 = vector.load %arg4[%c0, %c0_0] : memref<2x128xf32, #tpu.memory_space<vmem>>, vector<2x128xf32>
    %c0_1 = arith.constant 0 : index
    %1 = memref.load %arg2[%c0_1] : memref<1xf32, #tpu.memory_space<smem>>
    %2 = vector.broadcast %1 : f32 to vector<2x128xf32>
    %3 = arith.mulf %0, %2 : vector<2x128xf32>
    %c0_2 = arith.constant 0 : index
    %4 = memref.load %arg3[%c0_2] : memref<1xf32, #tpu.memory_space<smem>>
    %5 = vector.broadcast %4 : f32 to vector<2x128xf32>
    %6 = arith.addf %3, %5 : vector<2x128xf32>
    %c0_3 = arith.constant 0 : index
    %c0_4 = arith.constant 0 : index
    %7 = vector.load %arg5[%c0_3, %c0_4] : memref<2x128xf32, #tpu.memory_space<vmem>>, vector<2x128xf32>
    tpu.vector_store %arg5[%c0_3, %c0_4], %6 {strides = array<i32>} : memref<2x128xf32, #tpu.memory_space<vmem>>, vector<2x128xf32>,
    return
  }
  func.func @transform_0(%arg0: i32, %arg1: i32) -> i32 {
    %c0_i32 = arith.constant 0 : i32
    %c0_i32_0 = arith.constant 0 : i32
    return %c0_i32 : i32
  }
  func.func @transform_1(%arg0: i32, %arg1: i32) -> i32 {
    %c0_i32 = arith.constant 0 : i32
    %c0_i32_0 = arith.constant 0 : i32
    return %c0_i32 : i32
  }
  func.func @transform_2(%arg0: i32, %arg1: i32) -> (i32, i32) {
    %c0_i32 = arith.constant 0 : i32
    return %arg0, %arg1 : i32, i32
  }
  func.func @transform_3(%arg0: i32, %arg1: i32) -> (i32, i32) {
    %c0_i32 = arith.constant 0 : i32
    return %arg0, %arg1 : i32, i32
  }
}

</mosaic_0001>

<llo_original>
// kernel: tpu_custom_call.1
$region0: #{tpu_custom_call.1}
  #allocation0 [shape = 'u32[]', space=smem, size = 0x4, offset = 0x4, fixed_abs, tag = 'smem constant byte address 0x4 - core index']
  #allocation1 [shape = 'u32[144,128]{1,0:T(1,128)}', space=vmem, size = 0x12000, scoped, tag = 'internal scratch']
  #allocation2 [shape = 'f32[1]{0:T(128)S(6)}', space=smem, size = 0x200, scoped, tag = 'scoped memory for tpu_custom_call.1']
  #allocation3 [shape = 'f32[1]{0:T(128)S(6)}', space=smem, size = 0x200, scoped, tag = 'scoped memory for tpu_custom_call.1']
  %s0 = inlined_call_operand.<no memory space> [shape: f32[1], index: 0, kind: input, shape index: {}]
  %s1 = inlined_call_operand.<no memory space> [shape: f32[1], index: 1, kind: input, shape index: {}]
  %s2 = inlined_call_operand.vmem [shape: f32[2,128], index: 2, kind: input, shape index: {}]
  %s3 = inlined_call_operand.hbm [shape: f32[2,128], index: 3, kind: output, shape index: {}]
  %s4 = sld [smem:[#allocation0]]
  $region22: #{tpu_custom_call.1} parent=0
    _
  %s6 = ssub.s32 1, %s4
  %s7 = scalar_select 0, %s6, %s4
  %8 = sst [smem:[#allocation2]] %s0
  %9 = sst [smem:[#allocation3]] %s1
  $region1: #{tpu_custom_call.1} parent=0
    #allocation4 [shape = 'u8[1024]{0}', space=vmem, size = 0x400, scoped, tag = 'output window, operand 0, single buffered']
    #allocation5 [shape = 's32[1]{0}', space=sflag, size = 0x4, scoped, tag = 'scoped memory for tpu_custom_call.1']
    %10 = vsyncpa [#allocation5], 0
    // Predicated region
    $region2: #{tpu_custom_call.1} parent=1 // pred_check
      _
    $region3: #{tpu_custom_call.1} parent=1 // pred_check_branch
      %12 = sbr.rel (0) target = $region5
    $region4: #{tpu_custom_call.1} parent=1 // pred_region
      _
    $region5: #{tpu_custom_call.1} parent=1 // pred_fallthru
      _
    // Predicated region
    $region6: #{tpu_custom_call.1} parent=1 // pred_check
      _
    $region7: #{tpu_custom_call.1} parent=1 // pred_check_branch
      %14 = sbr.rel (0) target = $region9
    $region8: #{tpu_custom_call.1} parent=1 // pred_region
      _
    $region9: #{tpu_custom_call.1} parent=1 // pred_fallthru
      _
    // Predicated region
    $region10: #{tpu_custom_call.1} parent=1 // pred_check
      _
    $region11: #{tpu_custom_call.1} parent=1 // pred_check_branch
      %16 = sbr.rel (0) target = $region13
    $region12: #{tpu_custom_call.1} parent=1 // pred_region
      _
    $region13: #{tpu_custom_call.1} parent=1 // pred_fallthru
      _
    %v17 = vld [vmem:[%s2] sm:$0x3]
    %s18 = sld [smem:[#allocation2]]
    %v19 = vstv %s18
    %v20 = vmul.f32 %v17, %v19
    %s21 = sld [smem:[#allocation3]]
    %v22 = vstv %s21
    %v23 = vadd.f32 %v20, %v22
    %24 = vst [vmem:[#allocation4] sm:$0x3] %v23
    // Predicated region
    $region14: #{tpu_custom_call.1} parent=1 // pred_check
      _
    $region15: #{tpu_custom_call.1} parent=1 // pred_check_branch
      %26 = sbr.rel (0) target = $region17
    $region16: #{tpu_custom_call.1} parent=1 // pred_region
      %s28 = ssub.s32 32, 32
      %29 = vsyncadd [#allocation5], %s28
      %s31 = sshll.u32 [#allocation4], 4
      %s32 = int_to_ptr.vmem [resolvable:$true] %s31
      %34 = dma.vmem_to_hbm [thread:$0]  %s32, 32, %s3, [#allocation5]
    $region17: #{tpu_custom_call.1} parent=1 // pred_fallthru
      _
    // Predicated region
    $region18: #{tpu_custom_call.1} parent=1 // pred_check
      _
    $region19: #{tpu_custom_call.1} parent=1 // pred_check_branch
      %36 = sbr.rel (0) target = $region21
    $region20: #{tpu_custom_call.1} parent=1 // pred_region
      %37 = dma.done [#allocation5], 32
    $region21: #{tpu_custom_call.1} parent=1 // pred_fallthru
      _
    %38 = vsyncpa [#allocation5], 1

</llo_original>
